<compile_context>
chip_gen: v5e
topology: v5e:2x2
jax: 0.10.0
libtpu: 0.0.40
codegen_flags: <defaults>
</compile_context>

<pallas_src>
import functools

import jax
import jax.numpy as jnp
from jax.experimental import pallas as pl
from jax.experimental.pallas import tpu as pltpu


def _rational4_kernel(x_ref, o_ref, *, A):
    """Elementwise y = A * x^2 / (x^2 + A) on one VMEM block."""
    x = x_ref[...]
    # Widen narrow floats in-register; kernel is HBM-bound so this is free.
    if jnp.issubdtype(x.dtype, jnp.floating) and x.dtype.itemsize < 4:
        x = x.astype(jnp.float32)
    x2 = x * x
    y = (A * x2) / (x2 + A)
    o_ref[...] = y.astype(o_ref.dtype)


def _rational4_ref(x, A=4.0):
    x2 = x * x
    return (A * x2) / (x2 + A)


def _ceil_div(a, b):
    return -(-a // b)


def _pick_target_bytes():
    """(block_target_bytes, vmem_limit_bytes or None), per TPU generation."""
    kind = ""
    try:
        kind = jax.devices()[0].device_kind.lower()
    except Exception:
        pass
    if "v7" in kind:
        # 2 bufs x (in + out) x 6 MiB = 24 MiB pipelined VMEM; 48 MiB scoped
        # limit leaves headroom under v7x's 64 MiB physical VMEM.
        return 6 * 2**20, 48 * 2**20
    if "v5 lite" in kind or "v5e" in kind or "v5lite" in kind:
        # 8 MiB pipelined VMEM: safely inside v5e's 16 MiB default limit.
        return 2 * 2**20, None
    # v6e and unknown chips: 4 MiB blocks (16 MiB pipelined); set the scoped
    # limit explicitly so a v5e-class 16 MiB default can never fail.
    return 4 * 2**20, 32 * 2**20


def rational4(x, A=4.0, *, min_pallas_bytes=1 << 20):
    """Apply y = A*x^2/(x^2+A) elementwise via a Pallas TPU kernel."""
    orig_shape = x.shape
    dtype = x.dtype
    itemsize = jnp.dtype(dtype).itemsize
    n = x.size

    # Tiny inputs: pallas_call fixed overhead dominates; XLA fuses this for free.
    if n == 0 or n * itemsize < min_pallas_bytes:
        return _rational4_ref(x, float(A))

    # Widest lane-dense width (multiple of 128) that divides n exactly, so no
    # HBM-side pad/copy is ever needed (common case for NCHW activations).
    width = None
    for w in (2048, 1024, 512, 256, 128):
        if n % w == 0:
            width = w
            break
    if width is None:
        # TODO(synk): handle ragged tails in-kernel with a pl.when-guarded
        # masked store; the fused-jnp fallback avoids the old pad+slice copies.
        return _rational4_ref(x, float(A))

    rows = n // width
    x2d = x.reshape(rows, width)

    target_bytes, vmem_limit = _pick_target_bytes()

    # dtype-aware minimum sublane tile (f32: 8, bf16: 16, int8/fp8: 32).
    min_sub = {4: 8, 2: 16, 1: 32}.get(itemsize, 8)
    block_rows = max(min_sub, target_bytes // (width * itemsize))
    block_rows = (block_rows // min_sub) * min_sub
    if block_rows >= rows:
        # Whole array in one block; full row extent is legal even if it is
        # not a multiple of the sublane tile.
        block_rows = rows

    steps = _ceil_div(rows, block_rows)
    # v7x has 2 TensorCores: a small, odd step count leaves one core idle or
    # imbalanced.  Nudging to an even count costs one cheap step elsewhere.
    if 1 <= steps < 8 and steps % 2 == 1 and rows > min_sub:
        cand = _ceil_div(rows, steps + 1)
        cand = _ceil_div(cand, min_sub) * min_sub
        if 0 < cand < rows and _ceil_div(rows, cand) % 2 == 0:
            block_rows = cand
            steps = _ceil_div(rows, block_rows)

    cp_kwargs = {"dimension_semantics": ("parallel",)}
    if vmem_limit is not None:
        cp_kwargs["vmem_limit_bytes"] = vmem_limit

    kernel = functools.partial(_rational4_kernel, A=float(A))

    out2d = pl.pallas_call(
        kernel,
        out_shape=jax.ShapeDtypeStruct((rows, width), dtype),
        grid=(steps,),
        in_specs=[pl.BlockSpec((block_rows, width), lambda i: (i, 0))],
        out_specs=pl.BlockSpec((block_rows, width), lambda i: (i, 0)),
        compiler_params=pltpu.CompilerParams(**cp_kwargs),
    )(x2d)

    return out2d.reshape(orig_shape)


if __name__ == "__main__":
    key = jax.random.PRNGKey(0)
    # Small NCHW input consistent with typical activation usage.
    x = jax.random.normal(key, (2, 4, 16, 16), dtype=jnp.float32) * 3.0

    # Force the Pallas path even though this test tensor is tiny.
    y = jax.block_until_ready(rational4(x, A=4.0, min_pallas_bytes=0))
    y_ref = _rational4_ref(x, 4.0)
    assert y.shape == x.shape and y.dtype == x.dtype
    assert jnp.allclose(y, y_ref, atol=1e-6, rtol=1e-6), "f32 mismatch vs reference"

    # bf16 path: kernel upcasts to f32 in-register, matching an f32 reference.
    xb = x.astype(jnp.bfloat16)
    yb = jax.block_until_ready(rational4(xb, A=4.0, min_pallas_bytes=0))
    yb_ref = _rational4_ref(xb.astype(jnp.float32), 4.0).astype(jnp.bfloat16)
    assert yb.shape == xb.shape and yb.dtype == xb.dtype
    assert jnp.allclose(
        yb.astype(jnp.float32), yb_ref.astype(jnp.float32), atol=2e-2, rtol=2e-2
    ), "bf16 mismatch vs reference"

    # Default behavior on small inputs: fused-jnp fallback, same result.
    y_small = jax.block_until_ready(rational4(x, A=4.0))
    assert jnp.allclose(y_small, y_ref, atol=1e-6, rtol=1e-6)

    print("KERNEL_OK")
</pallas_src>

<mosaic_0001>
module attributes {stable_mosaic.version = 11 : i64} {
  func.func @_rational4_kernel(%arg0: i32, %arg1: memref<1x2048xf32, #tpu.memory_space<vmem>>, %arg2: memref<1x2048xf32, #tpu.memory_space<vmem>>) attributes {dimension_semantics = [#tpu.dimension_semantics<parallel>], iteration_bounds = array<i64: 1>, scalar_prefetch = 0 : i64, scratch_operands = 0 : i64, tpu.core_type = #tpu.core_type<tc>, window_params = [{transform_indices = @transform_0, window_bounds = array<i64: 1, 2048>}, {transform_indices = @transform_1, window_bounds = array<i64: 1, 2048>}]} {
    %c0 = arith.constant 0 : index
    %c0_0 = arith.constant 0 : index
    %0 = vector.load %arg1[%c0, %c0_0] : memref<1x2048xf32, #tpu.memory_space<vmem>>, vector<1x2048xf32>
    %1 = arith.mulf %0, %0 : vector<1x2048xf32>
    %cst = arith.constant 4.000000e+00 : f32
    %2 = vector.broadcast %cst : f32 to vector<1x2048xf32>
    %3 = arith.mulf %2, %1 : vector<1x2048xf32>
    %cst_1 = arith.constant 4.000000e+00 : f32
    %4 = vector.broadcast %cst_1 : f32 to vector<1x2048xf32>
    %5 = arith.addf %1, %4 : vector<1x2048xf32>
    %6 = arith.divf %3, %5 : vector<1x2048xf32>
    %c0_2 = arith.constant 0 : index
    %c0_3 = arith.constant 0 : index
    %7 = vector.load %arg2[%c0_2, %c0_3] : memref<1x2048xf32, #tpu.memory_space<vmem>>, vector<1x2048xf32>
    tpu.vector_store %arg2[%c0_2, %c0_3], %6 {strides = array<i32>} : memref<1x2048xf32, #tpu.memory_space<vmem>>, vector<1x2048xf32>,
    return
  }
  func.func @transform_0(%arg0: i32) -> (i32, i32) {
    %c0_i32 = arith.constant 0 : i32
    %c0_i32_0 = arith.constant 0 : i32
    return %arg0, %c0_i32 : i32, i32
  }
  func.func @transform_1(%arg0: i32) -> (i32, i32) {
    %c0_i32 = arith.constant 0 : i32
    %c0_i32_0 = arith.constant 0 : i32
    return %arg0, %c0_i32 : i32, i32
  }
}

</mosaic_0001>

<llo_original>
// kernel: tpu_custom_call.1
$region0: #{tpu_custom_call.1}
  #allocation0 [shape = 'u32[]', space=smem, size = 0x4, offset = 0x4, fixed_abs, tag = 'smem constant byte address 0x4 - core index']
  #allocation1 [shape = 'u32[72,128]{1,0:T(1,128)}', space=vmem, size = 0x9000, scoped, tag = 'internal scratch']
  %s0 = inlined_call_operand.hbm [shape: f32[1,2048], index: 0, kind: input, shape index: {}]
  %s1 = inlined_call_operand.hbm [shape: f32[1,2048], index: 1, kind: output, shape index: {}]
  %s2 = sld [smem:[#allocation0]]
  $region18: #{tpu_custom_call.1} parent=0
    _
  %s4 = ssub.s32 1, %s2
  %s5 = scalar_select 0, %s4, %s2
  $region1: #{tpu_custom_call.1} parent=0
    #allocation2 [shape = 'u8[8192]{0}', space=vmem, size = 0x2000, scoped, tag = 'input window, operand 0, single buffered']
    #allocation3 [shape = 's32[1]{0}', space=sflag, size = 0x4, scoped, tag = 'scoped memory for tpu_custom_call.1']
    #allocation4 [shape = 's32[1]{0}', space=sflag, size = 0x4, scoped, tag = 'scoped memory for tpu_custom_call.1']
    #allocation5 [shape = 'u8[8192]{0}', space=vmem, size = 0x2000, scoped, tag = 'output window, operand 0, single buffered']
    %6 = vsyncpa [#allocation3], 0
    %7 = vsyncpa [#allocation4], 0
    // Predicated region
    $region2: #{tpu_custom_call.1} parent=1 // pred_check
      _
    $region3: #{tpu_custom_call.1} parent=1 // pred_check_branch
      %9 = sbr.rel (0) target = $region5
    $region4: #{tpu_custom_call.1} parent=1 // pred_region
      %11 = vsyncadd [#allocation3], 0
      %s13 = sshll.u32 %s0, 4
      %s14 = int_to_ptr.hbm [resolvable:$true] %s13
      %s15 = sshll.u32 [#allocation2], 4
      %s16 = int_to_ptr.vmem [resolvable:$true] %s15
      %18 = dma.hbm_to_vmem [thread:$0]  %s14, 256, %s16, [#allocation3]
    $region5: #{tpu_custom_call.1} parent=1 // pred_fallthru
      _
    // Predicated region
    $region6: #{tpu_custom_call.1} parent=1 // pred_check
      _
    $region7: #{tpu_custom_call.1} parent=1 // pred_check_branch
      %20 = sbr.rel (0) target = $region9
    $region8: #{tpu_custom_call.1} parent=1 // pred_region
      %22 = dma.done [#allocation3], 256
    $region9: #{tpu_custom_call.1} parent=1 // pred_fallthru
      _
    %v23 = vld [vmem:[#allocation2] sm:$0xff]
    %v24 = vld [vmem:[#allocation2 + $0x8] sm:$0xff]
    %v25 = vmul.f32 %v23, %v23
    %v26 = vmul.f32 %v24, %v24
    %v27 = vmul.f32 %v25, 4.0
    %v28 = vmul.f32 %v26, 4.0
    %v29 = vadd.f32 %v25, 4.0
    %v30 = vadd.f32 %v26, 4.0
    %v31 = vrcp.pop %v29
    %v32 = vmul.f32 %v29, %v31
    %v33 = vsub.f32 1.0, %v32
    %v34 = vmul.f32 %v31, %v33
    %v35 = vadd.f32 %v31, %v34
    %vm36 = vweird.f32 %v29
    %vm37 = vweird.f32 %v31
    %vm38 = vmor %vm36, %vm37
    %v39 = vsel %vm38, %v31, %v35
    %v40 = vand.u32 2147483647, %v29
    %vm41 = vcmp.eq.f32.partialorder %v40, 8.507059e+37
    %v42 = vand.u32 %v29, 2147483648
    %v43 = vor.u32 1.1754944e-38, %v42
    %v44 = vsel %vm41, %v43, %v39
    %v45 = vmul.f32 %v27, %v44
    %v46 = vrcp.pop %v30
    %v47 = vmul.f32 %v30, %v46
    %v48 = vsub.f32 1.0, %v47
    %v49 = vmul.f32 %v46, %v48
    %v50 = vadd.f32 %v46, %v49
    %vm51 = vweird.f32 %v30
    %vm52 = vweird.f32 %v46
    %vm53 = vmor %vm51, %vm52
    %v54 = vsel %vm53, %v46, %v50
    %v55 = vand.u32 2147483647, %v30
    %vm56 = vcmp.eq.f32.partialorder %v55, 8.507059e+37
    %v57 = vand.u32 %v30, 2147483648
    %v58 = vor.u32 1.1754944e-38, %v57
    %v59 = vsel %vm56, %v58, %v54
    %v60 = vmul.f32 %v28, %v59
    %61 = vst [vmem:[#allocation5] sm:$0xff] %v45
    %62 = vst [vmem:[#allocation5 + $0x8] sm:$0xff] %v60
    // Predicated region
    $region10: #{tpu_custom_call.1} parent=1 // pred_check
      _
    $region11: #{tpu_custom_call.1} parent=1 // pred_check_branch
      %64 = sbr.rel (0) target = $region13
    $region12: #{tpu_custom_call.1} parent=1 // pred_region
      %66 = vsyncadd [#allocation4], 0
      %s68 = sshll.u32 [#allocation5], 4
      %s69 = int_to_ptr.vmem [resolvable:$true] %s68
      %s70 = sshll.u32 %s1, 4
      %s71 = int_to_ptr.hbm [resolvable:$true] %s70
      %73 = dma.vmem_to_hbm [thread:$0]  %s69, 256, %s71, [#allocation4]
    $region13: #{tpu_custom_call.1} parent=1 // pred_fallthru
      _
    // Predicated region
    $region14: #{tpu_custom_call.1} parent=1 // pred_check
      _
    $region15: #{tpu_custom_call.1} parent=1 // pred_check_branch
      %75 = sbr.rel (0) target = $region17
    $region16: #{tpu_custom_call.1} parent=1 // pred_region
      %77 = dma.done [#allocation4], 256
    $region17: #{tpu_custom_call.1} parent=1 // pred_fallthru
      _
    %78 = vsyncpa [#allocation3], 1
    %79 = vsyncpa [#allocation4], 1

</llo_original>
